<compile_context>
chip_gen: v7x
topology: tpu7x:2x2x1
jax: 0.10.0
libtpu: 0.0.40
codegen_flags: <defaults>
</compile_context>

<pallas_src>
import functools

import jax
import jax.numpy as jnp
from jax import lax
from jax.experimental import pallas as pl
from jax.experimental.pallas import tpu as pltpu

_LANE = 128  # TPU lane width.


def _round_up(n: int, m: int) -> int:
    return ((n + m - 1) // m) * m


def _actor_critic_kernel(x_ref, w1_ref, b1_ref, wh_ref, bh_ref, out_ref, *, actions: int):
    # Backbone first Linear + ReLU (bf16 MXU operands, f32 accumulation).
    x = x_ref[...].astype(jnp.bfloat16)
    h = jnp.dot(x, w1_ref[...], preferred_element_type=jnp.float32)
    h = jnp.maximum(h + b1_ref[...], 0.0)

    # Fused (model-final-Linear ∘ heads) matmul: columns [0, actions) are actor
    # logits, column `actions` is the critic value, the rest are zero padding.
    logits = jnp.dot(h.astype(jnp.bfloat16), wh_ref[...],
                     preferred_element_type=jnp.float32) + bh_ref[...]

    col = lax.broadcasted_iota(jnp.int32, logits.shape, 1)
    is_action = col < actions

    # Softmax over the action columns only (padded / value columns masked to -inf).
    a_logits = jnp.where(is_action, logits, -jnp.inf)
    m = jnp.max(a_logits, axis=1, keepdims=True)
    e = jnp.exp(a_logits - m)                       # exp(-inf) = 0 on masked cols
    denom = jnp.sum(e, axis=1, keepdims=True)
    r = pl.reciprocal(denom, approx=True)           # EUP vrcp (free slot)
    r = r * (2.0 - denom * r)                       # one Newton step -> f32 accuracy
    probs = e * r

    # Lane-dense store: probs in action columns, raw critic value in its column,
    # zeros elsewhere.  Single unmasked (block_b, 128) write.
    out_ref[...] = jnp.where(col == actions, logits, probs).astype(out_ref.dtype)


def prepare_params(params):
    """One-time prep of PyTorch-shaped (out, in) params into kernel-ready arrays."""
    w1 = jnp.asarray(params["w1"], jnp.float32)      # (HID, IN)
    b1 = jnp.asarray(params["b1"], jnp.float32)      # (HID,)
    w2 = jnp.asarray(params["w2"], jnp.float32)      # (FEAT, HID)
    b2 = jnp.asarray(params["b2"], jnp.float32)      # (FEAT,)
    wa = jnp.asarray(params["wa"], jnp.float32)      # (ACTIONS, FEAT)
    ba = jnp.asarray(params["ba"], jnp.float32)      # (ACTIONS,)
    wc = jnp.asarray(params["wc"], jnp.float32)      # (1, FEAT)
    bc = jnp.asarray(params["bc"], jnp.float32)      # (1,)

    hid, in_dim = w1.shape
    actions, feat = wa.shape
    heads = actions + 1
    padded = _round_up(heads, _LANE)                 # lane-dense fused head width
    hid_pad = _round_up(hid, _LANE)                  # lane-dense intermediate width

    # Heads as one (FEAT, padded) slab: [actor | critic | zeros].
    w_heads = jnp.zeros((feat, padded), jnp.float32)
    w_heads = w_heads.at[:, :actions].set(wa.T)
    w_heads = w_heads.at[:, actions:heads].set(wc.T)
    b_heads = jnp.zeros((1, padded), jnp.float32)
    b_heads = b_heads.at[:, :actions].set(ba.reshape(1, -1))
    b_heads = b_heads.at[:, actions:heads].set(bc.reshape(1, -1))

    # Fold the model's final Linear into the head slab (no nonlinearity between them):
    #   logits = relu(x W1^T + b1) @ (W2^T @ W_heads) + (b2 @ W_heads + b_heads)
    w_fused = w2.T @ w_heads                                   # (HID, padded)
    b_fused = b2.reshape(1, -1) @ w_heads + b_heads            # (1, padded)

    # Pad HID to a lane multiple: padded h columns are exactly 0 (zero w1 cols, zero
    # b1, relu(0)=0) and meet zero rows of the fused head weight -> no contribution.
    w1_p = jnp.zeros((in_dim, hid_pad), jnp.float32).at[:, :hid].set(w1.T)
    b1_p = jnp.zeros((1, hid_pad), jnp.float32).at[:, :hid].set(b1.reshape(1, -1))
    w_fused_p = jnp.zeros((hid_pad, padded), jnp.float32).at[:hid, :].set(w_fused)

    return {
        "w1": w1_p.astype(jnp.bfloat16),        # (IN, HID_pad)  bf16 MXU operand
        "b1": b1_p,                             # (1, HID_pad)   f32 bias
        "w_heads": w_fused_p.astype(jnp.bfloat16),  # (HID_pad, padded) bf16 MXU operand
        "b_heads": b_fused,                     # (1, padded)    f32 fused bias
        "actions": actions,
        "padded": padded,
        "hid_pad": hid_pad,
    }


def _vmem_capacity_bytes() -> int:
    try:
        return int(pltpu.get_tpu_info().vmem_capacity_bytes)
    except Exception:
        return 64 << 20   # conservative fallback (v7x per-TC VMEM)


def _choose_block_b(B, in_dim, hid_pad, out_pad, vmem_cap, weight_bytes):
    """Largest batch tile that fits a VMEM activation budget (multiple of 8 rows)."""
    # VMEM bytes per batch row: double-buffered f32 x block + f32 out block, plus
    # the f32 intermediate h tile.
    per_row = 2 * in_dim * 4 + 2 * out_pad * 4 + hid_pad * 4
    act_budget = min(vmem_cap // 2, 48 << 20) - 2 * weight_bytes
    act_budget = max(act_budget, 4 << 20)
    block_b = act_budget // per_row
    block_b = max(8, min(block_b, 512, _round_up(B, 8)))
    block_b = (block_b // 8) * 8
    # Megacore (v7x has 2 TCs): give the parallel grid >= 2 steps on mid/large batches
    # so a [256, 512]-row batch doesn't collapse to a single block on one core.
    if B >= 256 and pl.cdiv(B, block_b) < 2:
        block_b = _round_up(pl.cdiv(B, 2), 8)
    return block_b, per_row


def actor_critic_forward(x, prepped, use_critic: bool = True):
    """x: (B, IN) float32. prepped: output of prepare_params (called once).

    Returns (probs, value) matching the PyTorch module. For maximum throughput,
    jit the consumer together with this call so XLA fuses the output slices.
    """
    B, in_dim = x.shape
    actions = prepped["actions"]
    padded = prepped["padded"]
    hid_pad = prepped["hid_pad"]
    w1, b1 = prepped["w1"], prepped["b1"]
    wh, bh = prepped["w_heads"], prepped["b_heads"]

    weight_bytes = (w1.size * 2 + b1.size * 4 + wh.size * 2 + bh.size * 4)
    vmem_cap = _vmem_capacity_bytes()
    block_b, per_row = _choose_block_b(B, in_dim, hid_pad, padded, vmem_cap, weight_bytes)
    grid = (pl.cdiv(B, block_b),)   # cdiv grid: arbitrary B supported (last block masked)

    # VMEM limit derived from the actual footprint (with headroom), capped below
    # the physical capacity of this generation.
    need = 2 * weight_bytes + block_b * per_row + (8 << 20)
    vmem_limit = int(min(max(need, 32 << 20), int(vmem_cap * 0.9)))

    kernel = functools.partial(_actor_critic_kernel, actions=actions)

    def _call(single_buffer_weights: bool):
        if single_buffer_weights:
            # Constant index_map -> weights fetched once; single buffer halves
            # their VMEM residency.
            const = lambda a: pl.BlockSpec(a.shape, lambda i: (0, 0),
                                           pipeline_mode=pl.Buffered(1))
        else:
            const = lambda a: pl.BlockSpec(a.shape, lambda i: (0, 0))
        return pl.pallas_call(
            kernel,
            out_shape=jax.ShapeDtypeStruct((B, padded), jnp.float32),
            grid=grid,
            in_specs=[
                pl.BlockSpec((block_b, in_dim), lambda i: (i, 0)),
                const(w1), const(b1), const(wh), const(bh),
            ],
            out_specs=pl.BlockSpec((block_b, padded), lambda i: (i, 0)),
            compiler_params=pltpu.CompilerParams(
                dimension_semantics=("parallel",),
                vmem_limit_bytes=vmem_limit,
            ),
        )(x, w1, b1, wh, bh)

    try:
        out = _call(True)
    except Exception:
        # Older JAX without BlockSpec(pipeline_mode=...) support: default buffering.
        out = _call(False)

    probs = out[:, :actions]
    value = out[:, actions:actions + 1] if use_critic else None
    return probs, value


def _reference_forward(x, params):
    """Pure-JAX f32 reference replicating the PyTorch module semantics."""
    h = jnp.maximum(x @ params["w1"].T + params["b1"], 0.0)
    feat = h @ params["w2"].T + params["b2"]
    logits = feat @ params["wa"].T + params["ba"]
    probs = jax.nn.softmax(logits, axis=1)
    value = feat @ params["wc"].T + params["bc"]
    return probs, value


if __name__ == "__main__":
    # Small, deterministic synthetic configuration.
    B, IN, HID, FEAT, ACTIONS = 8, 32, 64, 32, 16

    key = jax.random.PRNGKey(0)
    keys = jax.random.split(key, 9)
    scale = 0.1
    params = {
        "w1": scale * jax.random.normal(keys[0], (HID, IN), jnp.float32),
        "b1": scale * jax.random.normal(keys[1], (HID,), jnp.float32),
        "w2": scale * jax.random.normal(keys[2], (FEAT, HID), jnp.float32),
        "b2": scale * jax.random.normal(keys[3], (FEAT,), jnp.float32),
        "wa": scale * jax.random.normal(keys[4], (ACTIONS, FEAT), jnp.float32),
        "ba": scale * jax.random.normal(keys[5], (ACTIONS,), jnp.float32),
        "wc": scale * jax.random.normal(keys[6], (1, FEAT), jnp.float32),
        "bc": scale * jax.random.normal(keys[7], (1,), jnp.float32),
    }
    x = jax.random.normal(keys[8], (B, IN), jnp.float32)

    # One-time parameter prep (transpose / head fusion / W2 fold / lane padding / bf16).
    prepped = prepare_params(params)

    probs, value = actor_critic_forward(x, prepped, use_critic=True)
    probs = jax.block_until_ready(probs)
    value = jax.block_until_ready(value)

    # Sanity-check against the pure-f32 JAX reference (bf16 operands + W2 fold
    # introduce ~1e-3-level differences; well within the tolerance below).
    ref_probs, ref_value = _reference_forward(x, params)
    assert probs.shape == (B, ACTIONS) and value.shape == (B, 1)
    assert jnp.allclose(probs, ref_probs, atol=1e-2, rtol=1e-2)
    assert jnp.allclose(value, ref_value, atol=1e-2, rtol=1e-2)
    assert jnp.allclose(jnp.sum(probs, axis=1), 1.0, atol=1e-4)

    # use_critic=False path (returns None for value, like the PyTorch module).
    probs2, value2 = actor_critic_forward(x, prepped, use_critic=False)
    probs2 = jax.block_until_ready(probs2)
    assert value2 is None
    assert jnp.allclose(probs2, ref_probs, atol=1e-2, rtol=1e-2)

    print("KERNEL_OK")
</pallas_src>

<mosaic_0001>
module attributes {stable_mosaic.version = 11 : i64} {
  func.func @_actor_critic_kernel(%arg0: i32, %arg1: memref<8x32xf32, #tpu.memory_space<vmem>>, %arg2: memref<32x128xbf16, #tpu.memory_space<vmem>>, %arg3: memref<1x128xf32, #tpu.memory_space<vmem>>, %arg4: memref<128x128xbf16, #tpu.memory_space<vmem>>, %arg5: memref<1x128xf32, #tpu.memory_space<vmem>>, %arg6: memref<8x128xf32, #tpu.memory_space<vmem>>) attributes {dimension_semantics = [#tpu.dimension_semantics<parallel>], iteration_bounds = array<i64: 1>, scalar_prefetch = 0 : i64, scratch_operands = 0 : i64, tpu.core_type = #tpu.core_type<tc>, window_params = [{transform_indices = @transform_0, window_bounds = array<i64: 8, 32>}, {pipeline_mode = #tpu.pipeline_mode<synchronous>, transform_indices = @transform_1, window_bounds = array<i64: 32, 128>}, {pipeline_mode = #tpu.pipeline_mode<synchronous>, transform_indices = @transform_2, window_bounds = array<i64: 1, 128>}, {pipeline_mode = #tpu.pipeline_mode<synchronous>, transform_indices = @transform_3, window_bounds = array<i64: 128, 128>}, {pipeline_mode = #tpu.pipeline_mode<synchronous>, transform_indices = @transform_4, window_bounds = array<i64: 1, 128>}, {transform_indices = @transform_5, window_bounds = array<i64: 8, 128>}]} {
    %c0 = arith.constant 0 : index
    %c0_0 = arith.constant 0 : index
    %0 = vector.load %arg1[%c0, %c0_0] : memref<8x32xf32, #tpu.memory_space<vmem>>, vector<8x32xf32>
    %1 = arith.truncf %0 : vector<8x32xf32> to vector<8x32xbf16>
    %c0_1 = arith.constant 0 : index
    %c0_2 = arith.constant 0 : index
    %2 = vector.load %arg2[%c0_1, %c0_2] : memref<32x128xbf16, #tpu.memory_space<vmem>>, vector<32x128xbf16>
    %cst = arith.constant dense<0.000000e+00> : vector<8x128xf32>
    %3 = tpu.matmul %1, %2, %cst {dimension_numbers = #tpu.dot_dimension_numbers<[1], [0], [0], [1], [0, 0, 1, 1], [], []>} : vector<8x32xbf16>, vector<32x128xbf16>, vector<8x128xf32> -> vector<8x128xf32>
    %c0_3 = arith.constant 0 : index
    %c0_4 = arith.constant 0 : index
    %4 = vector.load %arg3[%c0_3, %c0_4] : memref<1x128xf32, #tpu.memory_space<vmem>>, vector<1x128xf32>
    %5 = vector.broadcast %4 : vector<1x128xf32> to vector<8x128xf32>
    %6 = arith.addf %3, %5 : vector<8x128xf32>
    %cst_5 = arith.constant 0.000000e+00 : f32
    %7 = vector.broadcast %cst_5 : f32 to vector<8x128xf32>
    %8 = arith.maximumf %6, %7 : vector<8x128xf32>
    %9 = arith.truncf %8 : vector<8x128xf32> to vector<8x128xbf16>
    %c0_6 = arith.constant 0 : index
    %c0_7 = arith.constant 0 : index
    %10 = vector.load %arg4[%c0_6, %c0_7] : memref<128x128xbf16, #tpu.memory_space<vmem>>, vector<128x128xbf16>
    %cst_8 = arith.constant dense<0.000000e+00> : vector<8x128xf32>
    %11 = tpu.matmul %9, %10, %cst_8 {dimension_numbers = #tpu.dot_dimension_numbers<[1], [0], [0], [1], [0, 0, 1, 1], [], []>} : vector<8x128xbf16>, vector<128x128xbf16>, vector<8x128xf32> -> vector<8x128xf32>
    %c0_9 = arith.constant 0 : index
    %c0_10 = arith.constant 0 : index
    %12 = vector.load %arg5[%c0_9, %c0_10] : memref<1x128xf32, #tpu.memory_space<vmem>>, vector<1x128xf32>
    %13 = vector.broadcast %12 : vector<1x128xf32> to vector<8x128xf32>
    %14 = arith.addf %11, %13 : vector<8x128xf32>
    %15 = tpu.iota {dimensions = array<i32: 1>} : vector<8x128xi32>
    %c16_i32 = arith.constant 16 : i32
    %16 = vector.broadcast %c16_i32 : i32 to vector<8x128xi32>
    %17 = arith.cmpi slt, %15, %16 : vector<8x128xi32>
    %cst_11 = arith.constant 0xFF800000 : f32
    %18 = vector.broadcast %cst_11 : f32 to vector<8x128xf32>
    %19 = arith.select %17, %14, %18 : vector<8x128xi1>, vector<8x128xf32>
    %cst_12 = arith.constant dense<0xFF800000> : vector<8xf32>
    %20 = vector.multi_reduction <maximumf>, %19, %cst_12 [1] : vector<8x128xf32> to vector<8xf32>
    %21 = vector.shape_cast %20 : vector<8xf32> to vector<8x1xf32>
    %22 = vector.broadcast %21 : vector<8x1xf32> to vector<8x128xf32>
    %23 = arith.subf %19, %22 : vector<8x128xf32>
    %24 = math.exp %23 : vector<8x128xf32>
    %cst_13 = arith.constant dense<0.000000e+00> : vector<8xf32>
    %25 = vector.multi_reduction <add>, %24, %cst_13 [1] : vector<8x128xf32> to vector<8xf32>
    %26 = vector.shape_cast %25 : vector<8xf32> to vector<8x1xf32>
    %27 = tpu.reciprocal %26 {approx = true} : vector<8x1xf32> -> vector<8x1xf32>
    %28 = arith.mulf %26, %27 : vector<8x1xf32>
    %cst_14 = arith.constant 2.000000e+00 : f32
    %29 = vector.broadcast %cst_14 : f32 to vector<8x1xf32>
    %30 = arith.subf %29, %28 : vector<8x1xf32>
    %31 = arith.mulf %27, %30 : vector<8x1xf32>
    %32 = vector.broadcast %31 : vector<8x1xf32> to vector<8x128xf32>
    %33 = arith.mulf %24, %32 : vector<8x128xf32>
    %c16_i32_15 = arith.constant 16 : i32
    %34 = vector.broadcast %c16_i32_15 : i32 to vector<8x128xi32>
    %35 = arith.cmpi eq, %15, %34 : vector<8x128xi32>
    %36 = arith.select %35, %14, %33 : vector<8x128xi1>, vector<8x128xf32>
    %c0_16 = arith.constant 0 : index
    %c0_17 = arith.constant 0 : index
    %37 = vector.load %arg6[%c0_16, %c0_17] : memref<8x128xf32, #tpu.memory_space<vmem>>, vector<8x128xf32>
    tpu.vector_store %arg6[%c0_16, %c0_17], %36 {strides = array<i32>} : memref<8x128xf32, #tpu.memory_space<vmem>>, vector<8x128xf32>,
    return
  }
  func.func @transform_0(%arg0: i32) -> (i32, i32) {
    %c0_i32 = arith.constant 0 : i32
    %c0_i32_0 = arith.constant 0 : i32
    return %arg0, %c0_i32 : i32, i32
  }
  func.func @transform_1(%arg0: i32) -> (i32, i32) {
    %c0_i32 = arith.constant 0 : i32
    %c0_i32_0 = arith.constant 0 : i32
    %c0_i32_1 = arith.constant 0 : i32
    return %c0_i32, %c0_i32_0 : i32, i32
  }
  func.func @transform_2(%arg0: i32) -> (i32, i32) {
    %c0_i32 = arith.constant 0 : i32
    %c0_i32_0 = arith.constant 0 : i32
    %c0_i32_1 = arith.constant 0 : i32
    return %c0_i32, %c0_i32_0 : i32, i32
  }
  func.func @transform_3(%arg0: i32) -> (i32, i32) {
    %c0_i32 = arith.constant 0 : i32
    %c0_i32_0 = arith.constant 0 : i32
    %c0_i32_1 = arith.constant 0 : i32
    return %c0_i32, %c0_i32_0 : i32, i32
  }
  func.func @transform_4(%arg0: i32) -> (i32, i32) {
    %c0_i32 = arith.constant 0 : i32
    %c0_i32_0 = arith.constant 0 : i32
    %c0_i32_1 = arith.constant 0 : i32
    return %c0_i32, %c0_i32_0 : i32, i32
  }
  func.func @transform_5(%arg0: i32) -> (i32, i32) {
    %c0_i32 = arith.constant 0 : i32
    %c0_i32_0 = arith.constant 0 : i32
    return %arg0, %c0_i32 : i32, i32
  }
}

module attributes {stable_mosaic.version = 11 : i64} {
  func.func @_actor_critic_kernel(%arg0: i32, %arg1: memref<8x32xf32, #tpu.memory_space<vmem>>, %arg2: memref<32x128xbf16, #tpu.memory_space<vmem>>, %arg3: memref<1x128xf32, #tpu.memory_space<vmem>>, %arg4: memref<128x128xbf16, #tpu.memory_space<vmem>>, %arg5: memref<1x128xf32, #tpu.memory_space<vmem>>, %arg6: memref<8x128xf32, #tpu.memory_space<vmem>>) attributes {dimension_semantics = [#tpu.dimension_semantics<parallel>], iteration_bounds = array<i64: 1>, scalar_prefetch = 0 : i64, scratch_operands = 0 : i64, tpu.core_type = #tpu.core_type<tc>, window_params = [{transform_indices = @transform_0, window_bounds = array<i64: 8, 32>}, {pipeline_mode = #tpu.pipeline_mode<synchronous>, transform_indices = @transform_1, window_bounds = array<i64: 32, 128>}, {pipeline_mode = #tpu.pipeline_mode<synchronous>, transform_indices = @transform_2, window_bounds = array<i64: 1, 128>}, {pipeline_mode = #tpu.pipeline_mode<synchronous>, transform_indices = @transform_3, window_bounds = array<i64: 128, 128>}, {pipeline_mode = #tpu.pipeline_mode<synchronous>, transform_indices = @transform_4, window_bounds = array<i64: 1, 128>}, {transform_indices = @transform_5, window_bounds = array<i64: 8, 128>}]} {
    %c0 = arith.constant 0 : index
    %c0_0 = arith.constant 0 : index
    %0 = vector.load %arg1[%c0, %c0_0] : memref<8x32xf32, #tpu.memory_space<vmem>>, vector<8x32xf32>
    %1 = arith.truncf %0 : vector<8x32xf32> to vector<8x32xbf16>
    %c0_1 = arith.constant 0 : index
    %c0_2 = arith.constant 0 : index
    %2 = vector.load %arg2[%c0_1, %c0_2] : memref<32x128xbf16, #tpu.memory_space<vmem>>, vector<32x128xbf16>
    %cst = arith.constant dense<0.000000e+00> : vector<8x128xf32>
    %3 = tpu.matmul %1, %2, %cst {dimension_numbers = #tpu.dot_dimension_numbers<[1], [0], [0], [1], [0, 0, 1, 1], [], []>} : vector<8x32xbf16>, vector<32x128xbf16>, vector<8x128xf32> -> vector<8x128xf32>
    %c0_3 = arith.constant 0 : index
    %c0_4 = arith.constant 0 : index
    %4 = vector.load %arg3[%c0_3, %c0_4] : memref<1x128xf32, #tpu.memory_space<vmem>>, vector<1x128xf32>
    %5 = vector.broadcast %4 : vector<1x128xf32> to vector<8x128xf32>
    %6 = arith.addf %3, %5 : vector<8x128xf32>
    %cst_5 = arith.constant 0.000000e+00 : f32
    %7 = vector.broadcast %cst_5 : f32 to vector<8x128xf32>
    %8 = arith.maximumf %6, %7 : vector<8x128xf32>
    %9 = arith.truncf %8 : vector<8x128xf32> to vector<8x128xbf16>
    %c0_6 = arith.constant 0 : index
    %c0_7 = arith.constant 0 : index
    %10 = vector.load %arg4[%c0_6, %c0_7] : memref<128x128xbf16, #tpu.memory_space<vmem>>, vector<128x128xbf16>
    %cst_8 = arith.constant dense<0.000000e+00> : vector<8x128xf32>
    %11 = tpu.matmul %9, %10, %cst_8 {dimension_numbers = #tpu.dot_dimension_numbers<[1], [0], [0], [1], [0, 0, 1, 1], [], []>} : vector<8x128xbf16>, vector<128x128xbf16>, vector<8x128xf32> -> vector<8x128xf32>
    %c0_9 = arith.constant 0 : index
    %c0_10 = arith.constant 0 : index
    %12 = vector.load %arg5[%c0_9, %c0_10] : memref<1x128xf32, #tpu.memory_space<vmem>>, vector<1x128xf32>
    %13 = vector.broadcast %12 : vector<1x128xf32> to vector<8x128xf32>
    %14 = arith.addf %11, %13 : vector<8x128xf32>
    %15 = tpu.iota {dimensions = array<i32: 1>} : vector<8x128xi32>
    %c16_i32 = arith.constant 16 : i32
    %16 = vector.broadcast %c16_i32 : i32 to vector<8x128xi32>
    %17 = arith.cmpi slt, %15, %16 : vector<8x128xi32>
    %cst_11 = arith.constant 0xFF800000 : f32
    %18 = vector.broadcast %cst_11 : f32 to vector<8x128xf32>
    %19 = arith.select %17, %14, %18 : vector<8x128xi1>, vector<8x128xf32>
    %cst_12 = arith.constant dense<0xFF800000> : vector<8xf32>
    %20 = vector.multi_reduction <maximumf>, %19, %cst_12 [1] : vector<8x128xf32> to vector<8xf32>
    %21 = vector.shape_cast %20 : vector<8xf32> to vector<8x1xf32>
    %22 = vector.broadcast %21 : vector<8x1xf32> to vector<8x128xf32>
    %23 = arith.subf %19, %22 : vector<8x128xf32>
    %24 = math.exp %23 : vector<8x128xf32>
    %cst_13 = arith.constant dense<0.000000e+00> : vector<8xf32>
    %25 = vector.multi_reduction <add>, %24, %cst_13 [1] : vector<8x128xf32> to vector<8xf32>
    %26 = vector.shape_cast %25 : vector<8xf32> to vector<8x1xf32>
    %27 = tpu.reciprocal %26 {approx = true} : vector<8x1xf32> -> vector<8x1xf32>
    %28 = arith.mulf %26, %27 : vector<8x1xf32>
    %cst_14 = arith.constant 2.000000e+00 : f32
    %29 = vector.broadcast %cst_14 : f32 to vector<8x1xf32>
    %30 = arith.subf %29, %28 : vector<8x1xf32>
    %31 = arith.mulf %27, %30 : vector<8x1xf32>
    %32 = vector.broadcast %31 : vector<8x1xf32> to vector<8x128xf32>
    %33 = arith.mulf %24, %32 : vector<8x128xf32>
    %c16_i32_15 = arith.constant 16 : i32
    %34 = vector.broadcast %c16_i32_15 : i32 to vector<8x128xi32>
    %35 = arith.cmpi eq, %15, %34 : vector<8x128xi32>
    %36 = arith.select %35, %14, %33 : vector<8x128xi1>, vector<8x128xf32>
    %c0_16 = arith.constant 0 : index
    %c0_17 = arith.constant 0 : index
    %37 = vector.load %arg6[%c0_16, %c0_17] : memref<8x128xf32, #tpu.memory_space<vmem>>, vector<8x128xf32>
    tpu.vector_store %arg6[%c0_16, %c0_17], %36 {strides = array<i32>} : memref<8x128xf32, #tpu.memory_space<vmem>>, vector<8x128xf32>,
    return
  }
  func.func @transform_0(%arg0: i32) -> (i32, i32) {
    %c0_i32 = arith.constant 0 : i32
    %c0_i32_0 = arith.constant 0 : i32
    return %arg0, %c0_i32 : i32, i32
  }
  func.func @transform_1(%arg0: i32) -> (i32, i32) {
    %c0_i32 = arith.constant 0 : i32
    %c0_i32_0 = arith.constant 0 : i32
    %c0_i32_1 = arith.constant 0 : i32
    return %c0_i32, %c0_i32_0 : i32, i32
  }
  func.func @transform_2(%arg0: i32) -> (i32, i32) {
    %c0_i32 = arith.constant 0 : i32
    %c0_i32_0 = arith.constant 0 : i32
    %c0_i32_1 = arith.constant 0 : i32
    return %c0_i32, %c0_i32_0 : i32, i32
  }
  func.func @transform_3(%arg0: i32) -> (i32, i32) {
    %c0_i32 = arith.constant 0 : i32
    %c0_i32_0 = arith.constant 0 : i32
    %c0_i32_1 = arith.constant 0 : i32
    return %c0_i32, %c0_i32_0 : i32, i32
  }
  func.func @transform_4(%arg0: i32) -> (i32, i32) {
    %c0_i32 = arith.constant 0 : i32
    %c0_i32_0 = arith.constant 0 : i32
    %c0_i32_1 = arith.constant 0 : i32
    return %c0_i32, %c0_i32_0 : i32, i32
  }
  func.func @transform_5(%arg0: i32) -> (i32, i32) {
    %c0_i32 = arith.constant 0 : i32
    %c0_i32_0 = arith.constant 0 : i32
    return %arg0, %c0_i32 : i32, i32
  }
}

</mosaic_0001>

<llo_original>
// kernel: tpu_custom_call.1
$region0: #{tpu_custom_call.1}
  #allocation0 [shape = 'u32[]', space=smem, size = 0x4, offset = 0x4, fixed_abs, tag = 'smem constant byte address 0x4 - core index']
  #allocation1 [shape = 'u32[144,128]{1,0:T(1,128)}', space=vmem, size = 0x12000, scoped, tag = 'internal scratch']
  %s0 = inlined_call_operand.hbm [shape: f32[8,32], index: 0, kind: input, shape index: {}]
  %s1 = inlined_call_operand.hbm [shape: bf16[32,128], index: 1, kind: input, shape index: {}]
  %s2 = inlined_call_operand.vmem [shape: f32[1,128], index: 2, kind: input, shape index: {}]
  %s3 = inlined_call_operand.hbm [shape: bf16[128,128], index: 3, kind: input, shape index: {}]
  %s4 = inlined_call_operand.vmem [shape: f32[1,128], index: 4, kind: input, shape index: {}]
  %s5 = inlined_call_operand.hbm [shape: f32[8,128], index: 5, kind: output, shape index: {}]
  %s6 = sld [smem:[#allocation0]]
  $region42: #{tpu_custom_call.1} parent=0
    _
  %s8 = ssub.s32 1, %s6
  %s9 = scalar_select 0, %s8, %s6
  $region1: #{tpu_custom_call.1} parent=0
    #allocation2 [shape = 'u8[4096]{0}', space=vmem, size = 0x1000, scoped, tag = 'input window, operand 0, single buffered']
    #allocation3 [shape = 's32[1]{0}', space=sflag, size = 0x4, scoped, tag = 'scoped memory for tpu_custom_call.1']
    #allocation4 [shape = 's32[1]{0}', space=sflag, size = 0x4, scoped, tag = 'scoped memory for tpu_custom_call.1']
    #allocation5 [shape = 'u8[8192]{0}', space=vmem, size = 0x2000, scoped, tag = 'input window, operand 1, single buffered']
    #allocation6 [shape = 's32[1]{0}', space=sflag, size = 0x4, scoped, tag = 'scoped memory for tpu_custom_call.1']
    #allocation7 [shape = 'u8[32768]{0}', space=vmem, size = 0x8000, scoped, tag = 'input window, operand 3, single buffered']
    #allocation8 [shape = 'u8[4096]{0}', space=vmem, size = 0x1000, scoped, tag = 'output window, operand 0, single buffered']
    %10 = vsyncpa [#allocation3], 0
    %11 = vsyncpa [#allocation6], 0
    %12 = vsyncpa [#allocation4], 0
    // Predicated region
    $region2: #{tpu_custom_call.1} parent=1 // pred_check
      _
    $region3: #{tpu_custom_call.1} parent=1 // pred_check_branch
      %14 = sbr.rel (0) target = $region5
    $region4: #{tpu_custom_call.1} parent=1 // pred_region
      %s16 = ssub.s32 128, 128
      %17 = vsyncadd [#allocation3], %s16
      %s19 = sshll.u32 [#allocation2], 4
      %s20 = int_to_ptr.vmem [resolvable:$true] %s19
      %22 = dma.hbm_to_vmem [thread:$0]  %s0, 128, %s20, [#allocation3]
    $region5: #{tpu_custom_call.1} parent=1 // pred_fallthru
      _
    // Predicated region
    $region6: #{tpu_custom_call.1} parent=1 // pred_check
      _
    $region7: #{tpu_custom_call.1} parent=1 // pred_check_branch
      %24 = sbr.rel (0) target = $region9
    $region8: #{tpu_custom_call.1} parent=1 // pred_region
      %s26 = ssub.s32 256, 256
      %27 = vsyncadd [#allocation6], %s26
      %s28 = sshll.u32 [#allocation5], 4
      %s29 = int_to_ptr.vmem [resolvable:$true] %s28
      %34 = dma.hbm_to_vmem [thread:$0]  %s1, 256, %s29, [#allocation6], 64, 64, 4
    $region9: #{tpu_custom_call.1} parent=1 // pred_fallthru
      _
    // Predicated region
    $region10: #{tpu_custom_call.1} parent=1 // pred_check
      _
    $region11: #{tpu_custom_call.1} parent=1 // pred_check_branch
      %36 = sbr.rel (0) target = $region13
    $region12: #{tpu_custom_call.1} parent=1 // pred_region
      _
    $region13: #{tpu_custom_call.1} parent=1 // pred_fallthru
      _
    // Predicated region
    $region14: #{tpu_custom_call.1} parent=1 // pred_check
      _
    $region15: #{tpu_custom_call.1} parent=1 // pred_check_branch
      %38 = sbr.rel (0) target = $region17
    $region16: #{tpu_custom_call.1} parent=1 // pred_region
      %s40 = ssub.s32 1024, 1024
      %41 = vsyncadd [#allocation6], %s40
      %s42 = sshll.u32 [#allocation7], 4
      %s43 = int_to_ptr.vmem [resolvable:$true] %s42
      %48 = dma.hbm_to_vmem [thread:$0]  %s3, 1024, %s43, [#allocation6], 64, 64, 4
    $region17: #{tpu_custom_call.1} parent=1 // pred_fallthru
      _
    // Predicated region
    $region18: #{tpu_custom_call.1} parent=1 // pred_check
      _
    $region19: #{tpu_custom_call.1} parent=1 // pred_check_branch
      %50 = sbr.rel (0) target = $region21
    $region20: #{tpu_custom_call.1} parent=1 // pred_region
      _
    $region21: #{tpu_custom_call.1} parent=1 // pred_fallthru
      _
    // Predicated region
    $region22: #{tpu_custom_call.1} parent=1 // pred_check
      _
    $region23: #{tpu_custom_call.1} parent=1 // pred_check_branch
      %52 = sbr.rel (0) target = $region25
    $region24: #{tpu_custom_call.1} parent=1 // pred_region
      %53 = dma.done [#allocation3], 128
    $region25: #{tpu_custom_call.1} parent=1 // pred_fallthru
      _
    // Predicated region
    $region26: #{tpu_custom_call.1} parent=1 // pred_check
      _
    $region27: #{tpu_custom_call.1} parent=1 // pred_check_branch
      %55 = sbr.rel (0) target = $region29
    $region28: #{tpu_custom_call.1} parent=1 // pred_region
      %56 = dma.done [#allocation6], 256
    $region29: #{tpu_custom_call.1} parent=1 // pred_fallthru
      _
    // Predicated region
    $region30: #{tpu_custom_call.1} parent=1 // pred_check
      _
    $region31: #{tpu_custom_call.1} parent=1 // pred_check_branch
      %58 = sbr.rel (0) target = $region33
    $region32: #{tpu_custom_call.1} parent=1 // pred_region
      %59 = dma.done [#allocation6], 1024
    $region33: #{tpu_custom_call.1} parent=1 // pred_fallthru
      _
    %v61 = vld [vmem:[#allocation2] sm:$0xff]
    %v62 = vpack.c.bf16 %v61, %v61
    %v63 = vld [vmem:[#allocation5] sm:$0xf]
    %v64 = vld [vmem:[#allocation5 + $0x4] sm:$0xf]
    %v65 = vld [vmem:[#allocation5 + $0x8] sm:$0xf]
    %v66 = vld [vmem:[#allocation5 + $0xc] sm:$0xf]
    %v67 = vld [vmem:[%s2] sm:$0x1]
    %v69 = vlaneseq
    %v70 = vshrl.u32 %v69, 7
    %v71 = vsub.s32 0, %v70
    %v72 = vrot.slane %v67, %v71
    %v78 = vunpack.c.l.b16 %v63
    %v79 = vunpack.c.l.b16 %v64
    %v80 = vunpack.c.l.b16 %v65
    %v81 = vunpack.c.l.b16 %v66
    %v82 = vpack.c.b16 %v79, %v78
    %v83 = vpack.c.b16 %v81, %v80
    %vm86 = vcmask 261120
    %v88 = vsel %vm86, %v62, 0
    %90 = vmatprep.subr.bf16.mxu0 0
    %91 = vmatpush1.bf16.msra.mxu0 %v82
    %92 = vmatprep.subr.bf16.mxu0 0
    %93 = vmatpush1.bf16.msra.mxu0 %v83
    %94 = vmatprep.subr.bf16.mxu0 0
    %95 = vmatpush1.bf16.msra.mxu0 0
    %96 = vmatprep.subr.bf16.mxu0 0
    %97 = vmatpush1.bf16.msra.mxu0 0
    %98 = vmatprep.subr.bf16.mxu0 0
    %99 = vmatpush1.bf16.msra.mxu0 0
    %100 = vmatprep.subr.bf16.mxu0 0
    %101 = vmatpush1.bf16.msra.mxu0 0
    %102 = vmatprep.subr.bf16.mxu0 0
    %103 = vmatpush1.bf16.msra.mxu0 0
    %104 = vmatprep.subr.bf16.mxu0 0
    %105 = vmatpush1.bf16.msra.mxu0 0
    %106 = vmatprep.subr.bf16.mxu0 0
    %107 = vmatpush1.bf16.msra.mxu0 0
    %108 = vmatprep.subr.bf16.mxu0 0
    %109 = vmatpush1.bf16.msra.mxu0 0
    %110 = vmatprep.subr.bf16.mxu0 0
    %111 = vmatpush1.bf16.msra.mxu0 0
    %112 = vmatprep.subr.bf16.mxu0 0
    %113 = vmatpush1.bf16.msra.mxu0 0
    %114 = vmatprep.subr.bf16.mxu0 0
    %115 = vmatpush1.bf16.msra.mxu0 0
    %116 = vmatprep.subr.bf16.mxu0 0
    %117 = vmatpush1.bf16.msra.mxu0 0
    %118 = vmatprep.subr.bf16.mxu0 0
    %119 = vmatpush1.bf16.msra.mxu0 0
    %120 = vmatprep.subr.bf16.mxu0 0
    %121 = vmatpush1.bf16.msra.mxu0 0
    %122 = vmatprep.mubr.bf16.mxu0 0
    %123 = vmatmul.mubr.bf16.gmra.mrb[0].mxu0 %v88
    %v124 = vpop.f32.mrb[0].mxu0
    %v125 = vadd.f32 %v72, %v124
    %v126 = vpop.f32.mrb[0].mxu0
    %v127 = vpop.f32.mrb[0].mxu0
    %v128 = vpop.f32.mrb[0].mxu0
    %129 = vdwg.mxu0
    %v130 = vmax.f32 %v125, 0.0
    %v131 = vpack.c.bf16 %v130, %v130
    %v132 = vld [vmem:[#allocation7] sm:$0xf]
    %v133 = vld [vmem:[#allocation7 + $0x4] sm:$0xf]
    %v134 = vld [vmem:[#allocation7 + $0x8] sm:$0xf]
    %v135 = vld [vmem:[#allocation7 + $0xc] sm:$0xf]
    %v136 = vld [vmem:[#allocation7 + $0x10] sm:$0xf]
    %v137 = vld [vmem:[#allocation7 + $0x14] sm:$0xf]
    %v138 = vld [vmem:[#allocation7 + $0x18] sm:$0xf]
    %v139 = vld [vmem:[#allocation7 + $0x1c] sm:$0xf]
    %v140 = vld [vmem:[#allocation7 + $0x20] sm:$0xf]
    %v141 = vld [vmem:[#allocation7 + $0x24] sm:$0xf]
    %v142 = vld [vmem:[#allocation7 + $0x28] sm:$0xf]
    %v143 = vld [vmem:[#allocation7 + $0x2c] sm:$0xf]
    %v144 = vld [vmem:[#allocation7 + $0x30] sm:$0xf]
    %v145 = vld [vmem:[#allocation7 + $0x34] sm:$0xf]
    %v146 = vld [vmem:[#allocation7 + $0x38] sm:$0xf]
    %v147 = vld [vmem:[#allocation7 + $0x3c] sm:$0xf]
    %v148 = vld [vmem:[%s4] sm:$0x1]
    %v150 = vlaneseq
    %v151 = vshrl.u32 %v150, 7
    %v152 = vsub.s32 0, %v151
    %v153 = vrot.slane %v148, %v152
    %v171 = vunpack.c.l.b16 %v132
    %v172 = vunpack.c.l.b16 %v133
    %v173 = vunpack.c.l.b16 %v134
    %v174 = vunpack.c.l.b16 %v135
    %v175 = vunpack.c.l.b16 %v136
    %v176 = vunpack.c.l.b16 %v137
    %v177 = vunpack.c.l.b16 %v138
    %v178 = vunpack.c.l.b16 %v139
    %v179 = vunpack.c.l.b16 %v140
    %v180 = vunpack.c.l.b16 %v141
    %v181 = vunpack.c.l.b16 %v142
    %v182 = vunpack.c.l.b16 %v143
    %v183 = vunpack.c.l.b16 %v144
    %v184 = vunpack.c.l.b16 %v145
    %v185 = vunpack.c.l.b16 %v146
    %v186 = vunpack.c.l.b16 %v147
    %v187 = vpack.c.b16 %v172, %v171
    %v188 = vpack.c.b16 %v174, %v173
    %v189 = vpack.c.b16 %v176, %v175
    %v190 = vpack.c.b16 %v178, %v177
    %v191 = vpack.c.b16 %v180, %v179
    %v192 = vpack.c.b16 %v182, %v181
    %v193 = vpack.c.b16 %v184, %v183
    %v194 = vpack.c.b16 %v186, %v185
    %203 = vmatprep.subr.bf16.mxu0 0
    %204 = vmatpush1.bf16.msra.mxu0 %v187
    %205 = vmatprep.subr.bf16.mxu0 0
    %206 = vmatpush1.bf16.msra.mxu0 %v188
    %207 = vmatprep.subr.bf16.mxu0 0
    %208 = vmatpush1.bf16.msra.mxu0 %v189
    %209 = vmatprep.subr.bf16.mxu0 0
    %210 = vmatpush1.bf16.msra.mxu0 %v190
    %211 = vmatprep.subr.bf16.mxu0 0
    %212 = vmatpush1.bf16.msra.mxu0 %v191
    %213 = vmatprep.subr.bf16.mxu0 0
    %214 = vmatpush1.bf16.msra.mxu0 %v192
    %215 = vmatprep.subr.bf16.mxu0 0
    %216 = vmatpush1.bf16.msra.mxu0 %v193
    %217 = vmatprep.subr.bf16.mxu0 0
    %218 = vmatpush1.bf16.msra.mxu0 %v194
    %219 = vmatprep.subr.bf16.mxu0 0
    %220 = vmatpush1.bf16.msra.mxu0 0
    %221 = vmatprep.subr.bf16.mxu0 0
    %222 = vmatpush1.bf16.msra.mxu0 0
    %223 = vmatprep.subr.bf16.mxu0 0
    %224 = vmatpush1.bf16.msra.mxu0 0
    %225 = vmatprep.subr.bf16.mxu0 0
    %226 = vmatpush1.bf16.msra.mxu0 0
    %227 = vmatprep.subr.bf16.mxu0 0
    %228 = vmatpush1.bf16.msra.mxu0 0
    %229 = vmatprep.subr.bf16.mxu0 0
    %230 = vmatpush1.bf16.msra.mxu0 0
    %231 = vmatprep.subr.bf16.mxu0 0
    %232 = vmatpush1.bf16.msra.mxu0 0
    %233 = vmatprep.subr.bf16.mxu0 0
    %234 = vmatpush1.bf16.msra.mxu0 0
    %235 = vmatprep.mubr.bf16.mxu0 0
    %236 = vmatmul.mubr.bf16.gmra.mrb[0].mxu0 %v131
    %v237 = vpop.f32.mrb[0].mxu0
    %v238 = vadd.f32 %v153, %v237
    %v239 = vpop.f32.mrb[0].mxu0
    %v240 = vpop.f32.mrb[0].mxu0
    %v241 = vpop.f32.mrb[0].mxu0
    %242 = vdwg.mxu0
    %v243 = vlaneseq
    %v244 = vand.u32 %v243, 127
    %vm245 = vcmp.lt.s32.totalorder %v244, 16
    %v246 = vsel %vm245, %v238, -inf
    %247 = vmax.xlane.f32.xlu0 %v246
    %v248 = vpop.xlane.xlu0 %247
    %v249 = vsub.f32 %v246, %v248
    %v250 = vmul.f32 %v249, 1.442695
    %v251 = vpow.pop %v250
    %252 = vadd.xlane.f32.xlu0 %v251
    %v253 = vpop.xlane.xlu0 %252
    %v254 = vrcp.pop %v253
    %v255 = vmul.f32 %v253, %v254
    %v256 = vsub.f32 2.0, %v255
    %v257 = vmul.f32 %v254, %v256
    %v258 = vmul.f32 %v251, %v257
    %vm259 = vcmp.eq.s32.totalorder %v244, 16
    %v260 = vsel %vm259, %v238, %v258
    %261 = vst [vmem:[#allocation8] sm:$0xff] %v260
    // Predicated region
    $region34: #{tpu_custom_call.1} parent=1 // pred_check
      _
    $region35: #{tpu_custom_call.1} parent=1 // pred_check_branch
      %263 = sbr.rel (0) target = $region37
    $region36: #{tpu_custom_call.1} parent=1 // pred_region
      %s265 = ssub.s32 128, 128
      %266 = vsyncadd [#allocation4], %s265
      %s268 = sshll.u32 [#allocation8], 4
      %s269 = int_to_ptr.vmem [resolvable:$true] %s268
      %271 = dma.vmem_to_hbm [thread:$0]  %s269, 128, %s5, [#allocation4]
    $region37: #{tpu_custom_call.1} parent=1 // pred_fallthru
      _
    // Predicated region
    $region38: #{tpu_custom_call.1} parent=1 // pred_check
      _
    $region39: #{tpu_custom_call.1} parent=1 // pred_check_branch
      %273 = sbr.rel (0) target = $region41
    $region40: #{tpu_custom_call.1} parent=1 // pred_region
      %274 = dma.done [#allocation4], 128
    $region41: #{tpu_custom_call.1} parent=1 // pred_fallthru
      _
    %275 = vsyncpa [#allocation3], 1
    %276 = vsyncpa [#allocation6], 1
    %277 = vsyncpa [#allocation4], 1

// kernel: tpu_custom_call.1
$region0: #{tpu_custom_call.1}
  #allocation0 [shape = 'u32[]', space=smem, size = 0x4, offset = 0x4, fixed_abs, tag = 'smem constant byte address 0x4 - core index']
  #allocation1 [shape = 'u32[144,128]{1,0:T(1,128)}', space=vmem, size = 0x12000, scoped, tag = 'internal scratch']
  %s0 = inlined_call_operand.hbm [shape: f32[8,32], index: 0, kind: input, shape index: {}]
  %s1 = inlined_call_operand.hbm [shape: bf16[32,128], index: 1, kind: input, shape index: {}]
  %s2 = inlined_call_operand.vmem [shape: f32[1,128], index: 2, kind: input, shape index: {}]
  %s3 = inlined_call_operand.hbm [shape: bf16[128,128], index: 3, kind: input, shape index: {}]
  %s4 = inlined_call_operand.vmem [shape: f32[1,128], index: 4, kind: input, shape index: {}]
  %s5 = inlined_call_operand.hbm [shape: f32[8,128], index: 5, kind: output, shape index: {}]
  %s6 = sld [smem:[#allocation0]]
  $region42: #{tpu_custom_call.1} parent=0
    _
  %s8 = ssub.s32 1, %s6
  %s9 = scalar_select 0, %s8, %s6
  $region1: #{tpu_custom_call.1} parent=0
    #allocation2 [shape = 'u8[4096]{0}', space=vmem, size = 0x1000, scoped, tag = 'input window, operand 0, single buffered']
    #allocation3 [shape = 's32[1]{0}', space=sflag, size = 0x4, scoped, tag = 'scoped memory for tpu_custom_call.1']
    #allocation4 [shape = 's32[1]{0}', space=sflag, size = 0x4, scoped, tag = 'scoped memory for tpu_custom_call.1']
    #allocation5 [shape = 'u8[8192]{0}', space=vmem, size = 0x2000, scoped, tag = 'input window, operand 1, single buffered']
    #allocation6 [shape = 's32[1]{0}', space=sflag, size = 0x4, scoped, tag = 'scoped memory for tpu_custom_call.1']
    #allocation7 [shape = 'u8[32768]{0}', space=vmem, size = 0x8000, scoped, tag = 'input window, operand 3, single buffered']
    #allocation8 [shape = 'u8[4096]{0}', space=vmem, size = 0x1000, scoped, tag = 'output window, operand 0, single buffered']
    %10 = vsyncpa [#allocation3], 0
    %11 = vsyncpa [#allocation6], 0
    %12 = vsyncpa [#allocation4], 0
    // Predicated region
    $region2: #{tpu_custom_call.1} parent=1 // pred_check
      _
    $region3: #{tpu_custom_call.1} parent=1 // pred_check_branch
      %14 = sbr.rel (0) target = $region5
    $region4: #{tpu_custom_call.1} parent=1 // pred_region
      %s16 = ssub.s32 128, 128
      %17 = vsyncadd [#allocation3], %s16
      %s19 = sshll.u32 [#allocation2], 4
      %s20 = int_to_ptr.vmem [resolvable:$true] %s19
      %22 = dma.hbm_to_vmem [thread:$0]  %s0, 128, %s20, [#allocation3]
    $region5: #{tpu_custom_call.1} parent=1 // pred_fallthru
      _
    // Predicated region
    $region6: #{tpu_custom_call.1} parent=1 // pred_check
      _
    $region7: #{tpu_custom_call.1} parent=1 // pred_check_branch
      %24 = sbr.rel (0) target = $region9
    $region8: #{tpu_custom_call.1} parent=1 // pred_region
      %s26 = ssub.s32 256, 256
      %27 = vsyncadd [#allocation6], %s26
      %s28 = sshll.u32 [#allocation5], 4
      %s29 = int_to_ptr.vmem [resolvable:$true] %s28
      %34 = dma.hbm_to_vmem [thread:$0]  %s1, 256, %s29, [#allocation6], 64, 64, 4
    $region9: #{tpu_custom_call.1} parent=1 // pred_fallthru
      _
    // Predicated region
    $region10: #{tpu_custom_call.1} parent=1 // pred_check
      _
    $region11: #{tpu_custom_call.1} parent=1 // pred_check_branch
      %36 = sbr.rel (0) target = $region13
    $region12: #{tpu_custom_call.1} parent=1 // pred_region
      _
    $region13: #{tpu_custom_call.1} parent=1 // pred_fallthru
      _
    // Predicated region
    $region14: #{tpu_custom_call.1} parent=1 // pred_check
      _
    $region15: #{tpu_custom_call.1} parent=1 // pred_check_branch
      %38 = sbr.rel (0) target = $region17
    $region16: #{tpu_custom_call.1} parent=1 // pred_region
      %s40 = ssub.s32 1024, 1024
      %41 = vsyncadd [#allocation6], %s40
      %s42 = sshll.u32 [#allocation7], 4
      %s43 = int_to_ptr.vmem [resolvable:$true] %s42
      %48 = dma.hbm_to_vmem [thread:$0]  %s3, 1024, %s43, [#allocation6], 64, 64, 4
    $region17: #{tpu_custom_call.1} parent=1 // pred_fallthru
      _
    // Predicated region
    $region18: #{tpu_custom_call.1} parent=1 // pred_check
      _
    $region19: #{tpu_custom_call.1} parent=1 // pred_check_branch
      %50 = sbr.rel (0) target = $region21
    $region20: #{tpu_custom_call.1} parent=1 // pred_region
      _
    $region21: #{tpu_custom_call.1} parent=1 // pred_fallthru
      _
    // Predicated region
    $region22: #{tpu_custom_call.1} parent=1 // pred_check
      _
    $region23: #{tpu_custom_call.1} parent=1 // pred_check_branch
      %52 = sbr.rel (0) target = $region25
    $region24: #{tpu_custom_call.1} parent=1 // pred_region
      %53 = dma.done [#allocation3], 128
    $region25: #{tpu_custom_call.1} parent=1 // pred_fallthru
      _
    // Predicated region
    $region26: #{tpu_custom_call.1} parent=1 // pred_check
      _
    $region27: #{tpu_custom_call.1} parent=1 // pred_check_branch
      %55 = sbr.rel (0) target = $region29
    $region28: #{tpu_custom_call.1} parent=1 // pred_region
      %56 = dma.done [#allocation6], 256
    $region29: #{tpu_custom_call.1} parent=1 // pred_fallthru
      _
    // Predicated region
    $region30: #{tpu_custom_call.1} parent=1 // pred_check
      _
    $region31: #{tpu_custom_call.1} parent=1 // pred_check_branch
      %58 = sbr.rel (0) target = $region33
    $region32: #{tpu_custom_call.1} parent=1 // pred_region
      %59 = dma.done [#allocation6], 1024
    $region33: #{tpu_custom_call.1} parent=1 // pred_fallthru
      _
    %v61 = vld [vmem:[#allocation2] sm:$0xff]
    %v62 = vpack.c.bf16 %v61, %v61
    %v63 = vld [vmem:[#allocation5] sm:$0xf]
    %v64 = vld [vmem:[#allocation5 + $0x4] sm:$0xf]
    %v65 = vld [vmem:[#allocation5 + $0x8] sm:$0xf]
    %v66 = vld [vmem:[#allocation5 + $0xc] sm:$0xf]
    %v67 = vld [vmem:[%s2] sm:$0x1]
    %v69 = vlaneseq
    %v70 = vshrl.u32 %v69, 7
    %v71 = vsub.s32 0, %v70
    %v72 = vrot.slane %v67, %v71
    %v78 = vunpack.c.l.b16 %v63
    %v79 = vunpack.c.l.b16 %v64
    %v80 = vunpack.c.l.b16 %v65
    %v81 = vunpack.c.l.b16 %v66
    %v82 = vpack.c.b16 %v79, %v78
    %v83 = vpack.c.b16 %v81, %v80
    %vm86 = vcmask 261120
    %v88 = vsel %vm86, %v62, 0
    %90 = vmatprep.subr.bf16.mxu0 0
    %91 = vmatpush1.bf16.msra.mxu0 %v82
    %92 = vmatprep.subr.bf16.mxu0 0
    %93 = vmatpush1.bf16.msra.mxu0 %v83
    %94 = vmatprep.subr.bf16.mxu0 0
    %95 = vmatpush1.bf16.msra.mxu0 0
    %96 = vmatprep.subr.bf16.mxu0 0
    %97 = vmatpush1.bf16.msra.mxu0 0
    %98 = vmatprep.subr.bf16.mxu0 0
    %99 = vmatpush1.bf16.msra.mxu0 0
    %100 = vmatprep.subr.bf16.mxu0 0
    %101 = vmatpush1.bf16.msra.mxu0 0
    %102 = vmatprep.subr.bf16.mxu0 0
    %103 = vmatpush1.bf16.msra.mxu0 0
    %104 = vmatprep.subr.bf16.mxu0 0
    %105 = vmatpush1.bf16.msra.mxu0 0
    %106 = vmatprep.subr.bf16.mxu0 0
    %107 = vmatpush1.bf16.msra.mxu0 0
    %108 = vmatprep.subr.bf16.mxu0 0
    %109 = vmatpush1.bf16.msra.mxu0 0
    %110 = vmatprep.subr.bf16.mxu0 0
    %111 = vmatpush1.bf16.msra.mxu0 0
    %112 = vmatprep.subr.bf16.mxu0 0
    %113 = vmatpush1.bf16.msra.mxu0 0
    %114 = vmatprep.subr.bf16.mxu0 0
    %115 = vmatpush1.bf16.msra.mxu0 0
    %116 = vmatprep.subr.bf16.mxu0 0
    %117 = vmatpush1.bf16.msra.mxu0 0
    %118 = vmatprep.subr.bf16.mxu0 0
    %119 = vmatpush1.bf16.msra.mxu0 0
    %120 = vmatprep.subr.bf16.mxu0 0
    %121 = vmatpush1.bf16.msra.mxu0 0
    %122 = vmatprep.mubr.bf16.mxu0 0
    %123 = vmatmul.mubr.bf16.gmra.mrb[0].mxu0 %v88
    %v124 = vpop.f32.mrb[0].mxu0
    %v125 = vadd.f32 %v72, %v124
    %v126 = vpop.f32.mrb[0].mxu0
    %v127 = vpop.f32.mrb[0].mxu0
    %v128 = vpop.f32.mrb[0].mxu0
    %129 = vdwg.mxu0
    %v130 = vmax.f32 %v125, 0.0
    %v131 = vpack.c.bf16 %v130, %v130
    %v132 = vld [vmem:[#allocation7] sm:$0xf]
    %v133 = vld [vmem:[#allocation7 + $0x4] sm:$0xf]
    %v134 = vld [vmem:[#allocation7 + $0x8] sm:$0xf]
    %v135 = vld [vmem:[#allocation7 + $0xc] sm:$0xf]
    %v136 = vld [vmem:[#allocation7 + $0x10] sm:$0xf]
    %v137 = vld [vmem:[#allocation7 + $0x14] sm:$0xf]
    %v138 = vld [vmem:[#allocation7 + $0x18] sm:$0xf]
    %v139 = vld [vmem:[#allocation7 + $0x1c] sm:$0xf]
    %v140 = vld [vmem:[#allocation7 + $0x20] sm:$0xf]
    %v141 = vld [vmem:[#allocation7 + $0x24] sm:$0xf]
    %v142 = vld [vmem:[#allocation7 + $0x28] sm:$0xf]
    %v143 = vld [vmem:[#allocation7 + $0x2c] sm:$0xf]
    %v144 = vld [vmem:[#allocation7 + $0x30] sm:$0xf]
    %v145 = vld [vmem:[#allocation7 + $0x34] sm:$0xf]
    %v146 = vld [vmem:[#allocation7 + $0x38] sm:$0xf]
    %v147 = vld [vmem:[#allocation7 + $0x3c] sm:$0xf]
    %v148 = vld [vmem:[%s4] sm:$0x1]
    %v150 = vlaneseq
    %v151 = vshrl.u32 %v150, 7
    %v152 = vsub.s32 0, %v151
    %v153 = vrot.slane %v148, %v152
    %v171 = vunpack.c.l.b16 %v132
    %v172 = vunpack.c.l.b16 %v133
    %v173 = vunpack.c.l.b16 %v134
    %v174 = vunpack.c.l.b16 %v135
    %v175 = vunpack.c.l.b16 %v136
    %v176 = vunpack.c.l.b16 %v137
    %v177 = vunpack.c.l.b16 %v138
    %v178 = vunpack.c.l.b16 %v139
    %v179 = vunpack.c.l.b16 %v140
    %v180 = vunpack.c.l.b16 %v141
    %v181 = vunpack.c.l.b16 %v142
    %v182 = vunpack.c.l.b16 %v143
    %v183 = vunpack.c.l.b16 %v144
    %v184 = vunpack.c.l.b16 %v145
    %v185 = vunpack.c.l.b16 %v146
    %v186 = vunpack.c.l.b16 %v147
    %v187 = vpack.c.b16 %v172, %v171
    %v188 = vpack.c.b16 %v174, %v173
    %v189 = vpack.c.b16 %v176, %v175
    %v190 = vpack.c.b16 %v178, %v177
    %v191 = vpack.c.b16 %v180, %v179
    %v192 = vpack.c.b16 %v182, %v181
    %v193 = vpack.c.b16 %v184, %v183
    %v194 = vpack.c.b16 %v186, %v185
    %203 = vmatprep.subr.bf16.mxu0 0
    %204 = vmatpush1.bf16.msra.mxu0 %v187
    %205 = vmatprep.subr.bf16.mxu0 0
    %206 = vmatpush1.bf16.msra.mxu0 %v188
    %207 = vmatprep.subr.bf16.mxu0 0
    %208 = vmatpush1.bf16.msra.mxu0 %v189
    %209 = vmatprep.subr.bf16.mxu0 0
    %210 = vmatpush1.bf16.msra.mxu0 %v190
    %211 = vmatprep.subr.bf16.mxu0 0
    %212 = vmatpush1.bf16.msra.mxu0 %v191
    %213 = vmatprep.subr.bf16.mxu0 0
    %214 = vmatpush1.bf16.msra.mxu0 %v192
    %215 = vmatprep.subr.bf16.mxu0 0
    %216 = vmatpush1.bf16.msra.mxu0 %v193
    %217 = vmatprep.subr.bf16.mxu0 0
    %218 = vmatpush1.bf16.msra.mxu0 %v194
    %219 = vmatprep.subr.bf16.mxu0 0
    %220 = vmatpush1.bf16.msra.mxu0 0
    %221 = vmatprep.subr.bf16.mxu0 0
    %222 = vmatpush1.bf16.msra.mxu0 0
    %223 = vmatprep.subr.bf16.mxu0 0
    %224 = vmatpush1.bf16.msra.mxu0 0
    %225 = vmatprep.subr.bf16.mxu0 0
    %226 = vmatpush1.bf16.msra.mxu0 0
    %227 = vmatprep.subr.bf16.mxu0 0
    %228 = vmatpush1.bf16.msra.mxu0 0
    %229 = vmatprep.subr.bf16.mxu0 0
    %230 = vmatpush1.bf16.msra.mxu0 0
    %231 = vmatprep.subr.bf16.mxu0 0
    %232 = vmatpush1.bf16.msra.mxu0 0
    %233 = vmatprep.subr.bf16.mxu0 0
    %234 = vmatpush1.bf16.msra.mxu0 0
    %235 = vmatprep.mubr.bf16.mxu0 0
    %236 = vmatmul.mubr.bf16.gmra.mrb[0].mxu0 %v131
    %v237 = vpop.f32.mrb[0].mxu0
    %v238 = vadd.f32 %v153, %v237
    %v239 = vpop.f32.mrb[0].mxu0
    %v240 = vpop.f32.mrb[0].mxu0
    %v241 = vpop.f32.mrb[0].mxu0
    %242 = vdwg.mxu0
    %v243 = vlaneseq
    %v244 = vand.u32 %v243, 127
    %vm245 = vcmp.lt.s32.totalorder %v244, 16
    %v246 = vsel %vm245, %v238, -inf
    %247 = vmax.xlane.f32.xlu0 %v246
    %v248 = vpop.xlane.xlu0 %247
    %v249 = vsub.f32 %v246, %v248
    %v250 = vmul.f32 %v249, 1.442695
    %v251 = vpow.pop %v250
    %252 = vadd.xlane.f32.xlu0 %v251
    %v253 = vpop.xlane.xlu0 %252
    %v254 = vrcp.pop %v253
    %v255 = vmul.f32 %v253, %v254
    %v256 = vsub.f32 2.0, %v255
    %v257 = vmul.f32 %v254, %v256
    %v258 = vmul.f32 %v251, %v257
    %vm259 = vcmp.eq.s32.totalorder %v244, 16
    %v260 = vsel %vm259, %v238, %v258
    %261 = vst [vmem:[#allocation8] sm:$0xff] %v260
    // Predicated region
    $region34: #{tpu_custom_call.1} parent=1 // pred_check
      _
    $region35: #{tpu_custom_call.1} parent=1 // pred_check_branch
      %263 = sbr.rel (0) target = $region37
    $region36: #{tpu_custom_call.1} parent=1 // pred_region
      %s265 = ssub.s32 128, 128
      %266 = vsyncadd [#allocation4], %s265
      %s268 = sshll.u32 [#allocation8], 4
      %s269 = int_to_ptr.vmem [resolvable:$true] %s268
      %271 = dma.vmem_to_hbm [thread:$0]  %s269, 128, %s5, [#allocation4]
    $region37: #{tpu_custom_call.1} parent=1 // pred_fallthru
      _
    // Predicated region
    $region38: #{tpu_custom_call.1} parent=1 // pred_check
      _
    $region39: #{tpu_custom_call.1} parent=1 // pred_check_branch
      %273 = sbr.rel (0) target = $region41
    $region40: #{tpu_custom_call.1} parent=1 // pred_region
      %274 = dma.done [#allocation4], 128
    $region41: #{tpu_custom_call.1} parent=1 // pred_fallthru
      _
    %275 = vsyncpa [#allocation3], 1
    %276 = vsyncpa [#allocation6], 1
    %277 = vsyncpa [#allocation4], 1

</llo_original>
